<compile_context>
chip_gen: v5e
topology: v5e:2x2
jax: 0.10.0
libtpu: 0.0.40
codegen_flags: <defaults>
</compile_context>

<pallas_src>
import math
import numpy as np
import jax
import jax.numpy as jnp
from jax import lax
from jax.experimental import pallas as pl
from jax.experimental.pallas import tpu as pltpu

KH = KW = 3
C_IN = 3
C_MID = 8
C_OUT = 4
K = KH * KW * C_IN            # 27
K_PAD = 32                    # contraction dim padded to a sublane multiple
# TODO(synk): the original module declares conv2 with 16 input channels, which is
# inconsistent with conv1's 8 output channels (PyTorch forward would raise);
# conv2 uses 8 input channels here so the pipeline is well-defined.


def _fused_kernel(patch_ref, w1_ref, b1_ref, w2_ref, b2_ref, out_ref):
    # patch_ref : (4, K_PAD, BLK) bf16  quadrant-major stride-aware im2col patches
    # w1_ref    : (C_MID, K_PAD) bf16   conv1 weights (K zero-padded)
    # b1_ref    : (C_MID, 1)  f32       conv1 bias with the "-10" folded in
    # w2_ref    : (C_OUT, C_MID) f32    1x1 conv2 weights with 0.25 pool scale folded in
    # b2_ref    : (C_OUT, 1)  f32       conv2 bias with "-11" and "-7" folded in
    # out_ref   : (C_OUT, BLK) f32      lane-dense output slab
    w1 = w1_ref[...]
    b1 = b1_ref[...]
    blk = out_ref.shape[1]

    pooled = jnp.zeros((C_MID, blk), jnp.float32)
    # Four pooling quadrants -> four vreg-aligned dots; relu per quadrant, then sum.
    for q in range(4):
        v1 = jnp.dot(w1, patch_ref[q], preferred_element_type=jnp.float32) + b1
        pooled = pooled + jnp.maximum(v1, 0.0)          # relu(conv1(x) - 10)

    # conv2 (1x1) as channel matmul; 0.25 pooling scale already folded into w2.
    v5 = jnp.dot(w2_ref[...], pooled, preferred_element_type=jnp.float32) + b2_ref[...]
    out_ref[...] = jnp.maximum(v5, -7.0)                # relu(x - 11) - 7 == max(x - 18, -7)


def _round_up(a, m):
    return (a + m - 1) // m * m


def model_forward(x_nchw, w1, b1, w2, b2):
    """x_nchw: (N, 3, H, W) f32.  Returns (N, 4, H2, W2) f32 (NCHW, like PyTorch)."""
    N, _, H, W = x_nchw.shape
    H1, W1 = H - KH + 1, W - KW + 1                     # conv1 'valid' output
    Hp, Wp = H1 // 2, W1 // 2                           # avg-pool output
    H2, W2 = (Hp - 1) // 2 + 1, (Wp - 1) // 2 + 1       # conv2 stride-2 output
    S2 = H2 * W2
    cols = N * S2

    # Stride-aware im2col: only conv1 outputs at rows 4i+dr, cols 4j+dc that survive
    # the fused avg_pool(2,2) + conv2 stride-2 sampling are gathered (75% skipped).
    quads = []
    for dr in range(2):
        for dc in range(2):
            taps = [x_nchw[:, :, dr + kh:dr + kh + 4 * H2:4,
                           dc + kw:dc + kw + 4 * W2:4]
                    for kh in range(KH) for kw in range(KW)]
            quads.append(jnp.stack(taps, axis=2))       # (N, C_IN, 9, H2, W2)
    patches = jnp.stack(quads, axis=0)                  # (4, N, C_IN, 9, H2, W2)
    # -> (4, K, N*S2): K order = (cin, kh, kw) (matches w1.reshape), lane = n*S2 + s
    patches = jnp.transpose(patches, (0, 2, 3, 1, 4, 5)).reshape(4, K, cols)

    # Lane-dense padding: columns to a multiple of 128 lanes, K up to K_PAD sublanes.
    lanes = _round_up(cols, 128)
    blk = 128
    for cand in (2048, 1024, 512, 256):
        if lanes % cand == 0:
            blk = cand
            break
    patches = jnp.pad(patches, ((0, 0), (0, K_PAD - K), (0, lanes - cols)))
    patches = patches.astype(jnp.bfloat16)              # halve the dominant DMA bytes

    w1_flat = jnp.pad(w1.reshape(C_MID, K), ((0, 0), (0, K_PAD - K))).astype(jnp.bfloat16)
    w2_flat = (0.25 * w2.reshape(C_OUT, C_MID)).astype(jnp.float32)   # fold pool scale
    b1m = (b1 - 10.0).reshape(C_MID, 1).astype(jnp.float32)           # fold "-10"
    b2m = (b2 - 18.0).reshape(C_OUT, 1).astype(jnp.float32)           # fold "-11" and "-7"

    out = pl.pallas_call(
        _fused_kernel,
        out_shape=jax.ShapeDtypeStruct((C_OUT, lanes), jnp.float32),
        grid_spec=pltpu.PrefetchScalarGridSpec(
            num_scalar_prefetch=0,
            grid=(lanes // blk,),
            in_specs=[
                pl.BlockSpec((4, K_PAD, blk), lambda i: (0, 0, i)),
                pl.BlockSpec((C_MID, K_PAD), lambda i: (0, 0)),
                pl.BlockSpec((C_MID, 1), lambda i: (0, 0)),
                pl.BlockSpec((C_OUT, C_MID), lambda i: (0, 0)),
                pl.BlockSpec((C_OUT, 1), lambda i: (0, 0)),
            ],
            out_specs=pl.BlockSpec((C_OUT, blk), lambda i: (0, i)),
        ),
        compiler_params=pltpu.CompilerParams(
            dimension_semantics=("parallel",)),
    )(patches, w1_flat, b1m, w2_flat, b2m)

    out = out[:, :cols].reshape(C_OUT, N, H2, W2)
    return jnp.transpose(out, (1, 0, 2, 3))             # NCHW like PyTorch


def reference_forward(x, w1, b1, w2, b2):
    dn = ("NCHW", "OIHW", "NCHW")
    v1 = lax.conv_general_dilated(x, w1, (1, 1), "VALID", dimension_numbers=dn,
                                  precision=lax.Precision.HIGHEST) + b1.reshape(1, -1, 1, 1)
    v3 = jnp.maximum(v1 - 10.0, 0.0)
    v4 = lax.reduce_window(v3, 0.0, lax.add, (1, 1, 2, 2), (1, 1, 2, 2), "VALID") / 4.0
    v5 = lax.conv_general_dilated(v4, w2, (2, 2), "VALID", dimension_numbers=dn,
                                  precision=lax.Precision.HIGHEST) + b2.reshape(1, -1, 1, 1)
    v7 = jnp.maximum(v5 - 11.0, 0.0)
    return v7 - 7.0


if __name__ == "__main__":
    key = jax.random.PRNGKey(0)
    kx, k1, k2, k3, k4 = jax.random.split(key, 5)

    N, H, W = 2, 18, 18
    # scaled-up inputs so the "-10" / "-11" thresholds are actually exercised
    x = 30.0 * jax.random.normal(kx, (N, C_IN, H, W), dtype=jnp.float32)

    fan1 = C_IN * KH * KW
    bound1 = 1.0 / math.sqrt(fan1)
    w1 = jax.random.uniform(k1, (C_MID, C_IN, KH, KW), jnp.float32, -bound1, bound1)
    b1 = jax.random.uniform(k2, (C_MID,), jnp.float32, -bound1, bound1)

    fan2 = C_MID
    bound2 = 1.0 / math.sqrt(fan2)
    w2 = jax.random.uniform(k3, (C_OUT, C_MID, 1, 1), jnp.float32, -bound2, bound2)
    b2 = jax.random.uniform(k4, (C_OUT,), jnp.float32, -bound2, bound2)

    out = model_forward(x, w1, b1, w2, b2)
    out = jax.block_until_ready(out)

    ref = jax.block_until_ready(reference_forward(x, w1, b1, w2, b2))
    # bf16 patches/weights (f32 accumulate) -> slightly looser atol than pure-f32.
    np.testing.assert_allclose(np.asarray(out), np.asarray(ref), rtol=2e-2, atol=5e-2)

    print("KERNEL_OK")
</pallas_src>

<mosaic_0001>
module attributes {stable_mosaic.version = 11 : i64} {
  func.func @_fused_kernel(%arg0: i32, %arg1: memref<4x32x128xbf16, #tpu.memory_space<vmem>>, %arg2: memref<8x32xbf16, #tpu.memory_space<vmem>>, %arg3: memref<8x1xf32, #tpu.memory_space<vmem>>, %arg4: memref<4x8xf32, #tpu.memory_space<vmem>>, %arg5: memref<4x1xf32, #tpu.memory_space<vmem>>, %arg6: memref<4x128xf32, #tpu.memory_space<vmem>>) attributes {dimension_semantics = [#tpu.dimension_semantics<parallel>], iteration_bounds = array<i64: 1>, scalar_prefetch = 0 : i64, scratch_operands = 0 : i64, tpu.core_type = #tpu.core_type<tc>, window_params = [{transform_indices = @transform_0, window_bounds = array<i64: 4, 32, 128>}, {pipeline_mode = #tpu.pipeline_mode<synchronous>, transform_indices = @transform_1, window_bounds = array<i64: 8, 32>}, {pipeline_mode = #tpu.pipeline_mode<synchronous>, transform_indices = @transform_2, window_bounds = array<i64: 8, 1>}, {pipeline_mode = #tpu.pipeline_mode<synchronous>, transform_indices = @transform_3, window_bounds = array<i64: 4, 8>}, {pipeline_mode = #tpu.pipeline_mode<synchronous>, transform_indices = @transform_4, window_bounds = array<i64: 4, 1>}, {transform_indices = @transform_5, window_bounds = array<i64: 4, 128>}]} {
    %c0 = arith.constant 0 : index
    %c0_0 = arith.constant 0 : index
    %0 = vector.load %arg2[%c0, %c0_0] : memref<8x32xbf16, #tpu.memory_space<vmem>>, vector<8x32xbf16>
    %c0_1 = arith.constant 0 : index
    %c0_2 = arith.constant 0 : index
    %1 = vector.load %arg3[%c0_1, %c0_2] : memref<8x1xf32, #tpu.memory_space<vmem>>, vector<8x1xf32>
    %cst = arith.constant 0.000000e+00 : f32
    %2 = vector.broadcast %cst : f32 to vector<8x128xf32>
    %c0_3 = arith.constant 0 : index
    %c0_4 = arith.constant 0 : index
    %c0_5 = arith.constant 0 : index
    %3 = vector.load %arg1[%c0_3, %c0_4, %c0_5] : memref<4x32x128xbf16, #tpu.memory_space<vmem>>, vector<1x32x128xbf16>
    %4 = vector.shape_cast %3 : vector<1x32x128xbf16> to vector<32x128xbf16>
    %cst_6 = arith.constant dense<0.000000e+00> : vector<8x128xf32>
    %5 = tpu.matmul %0, %4, %cst_6 {dimension_numbers = #tpu.dot_dimension_numbers<[1], [0], [0], [1], [0, 0, 1, 1], [], []>} : vector<8x32xbf16>, vector<32x128xbf16>, vector<8x128xf32> -> vector<8x128xf32>
    %6 = vector.broadcast %1 : vector<8x1xf32> to vector<8x128xf32>
    %7 = arith.addf %5, %6 : vector<8x128xf32>
    %cst_7 = arith.constant 0.000000e+00 : f32
    %8 = vector.broadcast %cst_7 : f32 to vector<8x128xf32>
    %9 = arith.maximumf %7, %8 : vector<8x128xf32>
    %10 = arith.addf %2, %9 : vector<8x128xf32>
    %c1 = arith.constant 1 : index
    %c0_8 = arith.constant 0 : index
    %c0_9 = arith.constant 0 : index
    %11 = vector.load %arg1[%c1, %c0_8, %c0_9] : memref<4x32x128xbf16, #tpu.memory_space<vmem>>, vector<1x32x128xbf16>
    %12 = vector.shape_cast %11 : vector<1x32x128xbf16> to vector<32x128xbf16>
    %cst_10 = arith.constant dense<0.000000e+00> : vector<8x128xf32>
    %13 = tpu.matmul %0, %12, %cst_10 {dimension_numbers = #tpu.dot_dimension_numbers<[1], [0], [0], [1], [0, 0, 1, 1], [], []>} : vector<8x32xbf16>, vector<32x128xbf16>, vector<8x128xf32> -> vector<8x128xf32>
    %14 = vector.broadcast %1 : vector<8x1xf32> to vector<8x128xf32>
    %15 = arith.addf %13, %14 : vector<8x128xf32>
    %cst_11 = arith.constant 0.000000e+00 : f32
    %16 = vector.broadcast %cst_11 : f32 to vector<8x128xf32>
    %17 = arith.maximumf %15, %16 : vector<8x128xf32>
    %18 = arith.addf %10, %17 : vector<8x128xf32>
    %c2 = arith.constant 2 : index
    %c0_12 = arith.constant 0 : index
    %c0_13 = arith.constant 0 : index
    %19 = vector.load %arg1[%c2, %c0_12, %c0_13] : memref<4x32x128xbf16, #tpu.memory_space<vmem>>, vector<1x32x128xbf16>
    %20 = vector.shape_cast %19 : vector<1x32x128xbf16> to vector<32x128xbf16>
    %cst_14 = arith.constant dense<0.000000e+00> : vector<8x128xf32>
    %21 = tpu.matmul %0, %20, %cst_14 {dimension_numbers = #tpu.dot_dimension_numbers<[1], [0], [0], [1], [0, 0, 1, 1], [], []>} : vector<8x32xbf16>, vector<32x128xbf16>, vector<8x128xf32> -> vector<8x128xf32>
    %22 = vector.broadcast %1 : vector<8x1xf32> to vector<8x128xf32>
    %23 = arith.addf %21, %22 : vector<8x128xf32>
    %cst_15 = arith.constant 0.000000e+00 : f32
    %24 = vector.broadcast %cst_15 : f32 to vector<8x128xf32>
    %25 = arith.maximumf %23, %24 : vector<8x128xf32>
    %26 = arith.addf %18, %25 : vector<8x128xf32>
    %c3 = arith.constant 3 : index
    %c0_16 = arith.constant 0 : index
    %c0_17 = arith.constant 0 : index
    %27 = vector.load %arg1[%c3, %c0_16, %c0_17] : memref<4x32x128xbf16, #tpu.memory_space<vmem>>, vector<1x32x128xbf16>
    %28 = vector.shape_cast %27 : vector<1x32x128xbf16> to vector<32x128xbf16>
    %cst_18 = arith.constant dense<0.000000e+00> : vector<8x128xf32>
    %29 = tpu.matmul %0, %28, %cst_18 {dimension_numbers = #tpu.dot_dimension_numbers<[1], [0], [0], [1], [0, 0, 1, 1], [], []>} : vector<8x32xbf16>, vector<32x128xbf16>, vector<8x128xf32> -> vector<8x128xf32>
    %30 = vector.broadcast %1 : vector<8x1xf32> to vector<8x128xf32>
    %31 = arith.addf %29, %30 : vector<8x128xf32>
    %cst_19 = arith.constant 0.000000e+00 : f32
    %32 = vector.broadcast %cst_19 : f32 to vector<8x128xf32>
    %33 = arith.maximumf %31, %32 : vector<8x128xf32>
    %34 = arith.addf %26, %33 : vector<8x128xf32>
    %c0_20 = arith.constant 0 : index
    %c0_21 = arith.constant 0 : index
    %35 = vector.load %arg4[%c0_20, %c0_21] : memref<4x8xf32, #tpu.memory_space<vmem>>, vector<4x8xf32>
    %cst_22 = arith.constant dense<0.000000e+00> : vector<4x128xf32>
    %36 = tpu.matmul %35, %34, %cst_22 {dimension_numbers = #tpu.dot_dimension_numbers<[1], [0], [0], [1], [0, 0, 1, 1], [], []>} : vector<4x8xf32>, vector<8x128xf32>, vector<4x128xf32> -> vector<4x128xf32>
    %c0_23 = arith.constant 0 : index
    %c0_24 = arith.constant 0 : index
    %37 = vector.load %arg5[%c0_23, %c0_24] : memref<4x1xf32, #tpu.memory_space<vmem>>, vector<4x1xf32>
    %38 = vector.broadcast %37 : vector<4x1xf32> to vector<4x128xf32>
    %39 = arith.addf %36, %38 : vector<4x128xf32>
    %cst_25 = arith.constant -7.000000e+00 : f32
    %40 = vector.broadcast %cst_25 : f32 to vector<4x128xf32>
    %41 = arith.maximumf %39, %40 : vector<4x128xf32>
    %c0_26 = arith.constant 0 : index
    %c0_27 = arith.constant 0 : index
    %42 = vector.load %arg6[%c0_26, %c0_27] : memref<4x128xf32, #tpu.memory_space<vmem>>, vector<4x128xf32>
    tpu.vector_store %arg6[%c0_26, %c0_27], %41 {strides = array<i32>} : memref<4x128xf32, #tpu.memory_space<vmem>>, vector<4x128xf32>,
    return
  }
  func.func @transform_0(%arg0: i32) -> (i32, i32, i32) {
    %c0_i32 = arith.constant 0 : i32
    %c0_i32_0 = arith.constant 0 : i32
    %c0_i32_1 = arith.constant 0 : i32
    return %c0_i32, %c0_i32_0, %arg0 : i32, i32, i32
  }
  func.func @transform_1(%arg0: i32) -> (i32, i32) {
    %c0_i32 = arith.constant 0 : i32
    %c0_i32_0 = arith.constant 0 : i32
    %c0_i32_1 = arith.constant 0 : i32
    return %c0_i32, %c0_i32_0 : i32, i32
  }
  func.func @transform_2(%arg0: i32) -> (i32, i32) {
    %c0_i32 = arith.constant 0 : i32
    %c0_i32_0 = arith.constant 0 : i32
    %c0_i32_1 = arith.constant 0 : i32
    return %c0_i32, %c0_i32_0 : i32, i32
  }
  func.func @transform_3(%arg0: i32) -> (i32, i32) {
    %c0_i32 = arith.constant 0 : i32
    %c0_i32_0 = arith.constant 0 : i32
    %c0_i32_1 = arith.constant 0 : i32
    return %c0_i32, %c0_i32_0 : i32, i32
  }
  func.func @transform_4(%arg0: i32) -> (i32, i32) {
    %c0_i32 = arith.constant 0 : i32
    %c0_i32_0 = arith.constant 0 : i32
    %c0_i32_1 = arith.constant 0 : i32
    return %c0_i32, %c0_i32_0 : i32, i32
  }
  func.func @transform_5(%arg0: i32) -> (i32, i32) {
    %c0_i32 = arith.constant 0 : i32
    %c0_i32_0 = arith.constant 0 : i32
    return %c0_i32, %arg0 : i32, i32
  }
}

</mosaic_0001>

<llo_original>
// kernel: tpu_custom_call.1
$region0: #{tpu_custom_call.1}
  #allocation0 [shape = 'u32[]', space=smem, size = 0x4, offset = 0x4, fixed_abs, tag = 'smem constant byte address 0x4 - core index']
  #allocation1 [shape = 'u32[72,128]{1,0:T(1,128)}', space=vmem, size = 0x9000, scoped, tag = 'internal scratch']
  %s0 = inlined_call_operand.hbm [shape: bf16[4,32,128], index: 0, kind: input, shape index: {}]
  %s1 = inlined_call_operand.vmem [shape: bf16[8,32], index: 1, kind: input, shape index: {}]
  %s2 = inlined_call_operand.vmem [shape: f32[8,1], index: 2, kind: input, shape index: {}]
  %s3 = inlined_call_operand.vmem [shape: f32[4,8], index: 3, kind: input, shape index: {}]
  %s4 = inlined_call_operand.vmem [shape: f32[4,1], index: 4, kind: input, shape index: {}]
  %s5 = inlined_call_operand.hbm [shape: f32[4,128], index: 5, kind: output, shape index: {}]
  %s6 = sld [smem:[#allocation0]]
  $region34: #{tpu_custom_call.1} parent=0
    _
  %s8 = ssub.s32 1, %s6
  %s9 = scalar_select 0, %s8, %s6
  $region1: #{tpu_custom_call.1} parent=0
    #allocation2 [shape = 'u8[32768]{0}', space=vmem, size = 0x8000, scoped, tag = 'input window, operand 0, single buffered']
    #allocation3 [shape = 's32[1]{0}', space=sflag, size = 0x4, scoped, tag = 'scoped memory for tpu_custom_call.1']
    #allocation4 [shape = 's32[1]{0}', space=sflag, size = 0x4, scoped, tag = 'scoped memory for tpu_custom_call.1']
    #allocation5 [shape = 'u8[2048]{0}', space=vmem, size = 0x800, scoped, tag = 'output window, operand 0, single buffered']
    %10 = vsyncpa [#allocation3], 0
    %11 = vsyncpa [#allocation4], 0
    // Predicated region
    $region2: #{tpu_custom_call.1} parent=1 // pred_check
      _
    $region3: #{tpu_custom_call.1} parent=1 // pred_check_branch
      %13 = sbr.rel (0) target = $region5
    $region4: #{tpu_custom_call.1} parent=1 // pred_region
      %15 = vsyncadd [#allocation3], 0
      %s16 = sshll.u32 %s0, 4
      %s17 = int_to_ptr.hbm [resolvable:$true] %s16
      %s18 = sshll.u32 [#allocation2], 4
      %s19 = int_to_ptr.vmem [resolvable:$true] %s18
      %24 = dma.hbm_to_vmem [thread:$0]  %s17, 1024, %s19, [#allocation3], 64, 64, 4
    $region5: #{tpu_custom_call.1} parent=1 // pred_fallthru
      _
    // Predicated region
    $region6: #{tpu_custom_call.1} parent=1 // pred_check
      _
    $region7: #{tpu_custom_call.1} parent=1 // pred_check_branch
      %26 = sbr.rel (0) target = $region9
    $region8: #{tpu_custom_call.1} parent=1 // pred_region
      _
    $region9: #{tpu_custom_call.1} parent=1 // pred_fallthru
      _
    // Predicated region
    $region10: #{tpu_custom_call.1} parent=1 // pred_check
      _
    $region11: #{tpu_custom_call.1} parent=1 // pred_check_branch
      %28 = sbr.rel (0) target = $region13
    $region12: #{tpu_custom_call.1} parent=1 // pred_region
      _
    $region13: #{tpu_custom_call.1} parent=1 // pred_fallthru
      _
    // Predicated region
    $region14: #{tpu_custom_call.1} parent=1 // pred_check
      _
    $region15: #{tpu_custom_call.1} parent=1 // pred_check_branch
      %30 = sbr.rel (0) target = $region17
    $region16: #{tpu_custom_call.1} parent=1 // pred_region
      _
    $region17: #{tpu_custom_call.1} parent=1 // pred_fallthru
      _
    // Predicated region
    $region18: #{tpu_custom_call.1} parent=1 // pred_check
      _
    $region19: #{tpu_custom_call.1} parent=1 // pred_check_branch
      %32 = sbr.rel (0) target = $region21
    $region20: #{tpu_custom_call.1} parent=1 // pred_region
      _
    $region21: #{tpu_custom_call.1} parent=1 // pred_fallthru
      _
    // Predicated region
    $region22: #{tpu_custom_call.1} parent=1 // pred_check
      _
    $region23: #{tpu_custom_call.1} parent=1 // pred_check_branch
      %34 = sbr.rel (0) target = $region25
    $region24: #{tpu_custom_call.1} parent=1 // pred_region
      %36 = dma.done [#allocation3], 1024
    $region25: #{tpu_custom_call.1} parent=1 // pred_fallthru
      _
    %v38 = vld [vmem:[%s1] sm:$0xf]
    %v39 = vld [vmem:[%s2] sm:$0xff]
    %v40 = vld [vmem:[#allocation2] sm:$0xf]
    %v41 = vld [vmem:[#allocation2 + $0x4] sm:$0xf]
    %v42 = vld [vmem:[#allocation2 + $0x8] sm:$0xf]
    %v43 = vld [vmem:[#allocation2 + $0xc] sm:$0xf]
    %45 = vset.pattern.permute.xlu0 0
    %46 = vperm.xlu0 %45, %v39
    %v47 = vpop.permute.xlu0 %46
    %v53 = vunpack.c.l.b16 %v40
    %v54 = vunpack.c.l.b16 %v41
    %v55 = vunpack.c.l.b16 %v42
    %v56 = vunpack.c.l.b16 %v43
    %v57 = vpack.c.b16 %v54, %v53
    %v58 = vpack.c.b16 %v56, %v55
    %vm61 = vcmask 261120
    %v63 = vsel %vm61, %v38, 0
    %65 = vmatpush.bf16.msra.mxu0 0
    %66 = vmatpush.bf16.msra.mxu0 0
    %67 = vmatpush.bf16.msra.mxu0 0
    %68 = vmatpush.bf16.msra.mxu0 0
    %69 = vmatpush.bf16.msra.mxu0 0
    %70 = vmatpush.bf16.msra.mxu0 0
    %71 = vmatpush.bf16.msra.mxu0 %v58
    %72 = vmatpush.bf16.msra.mxu0 %v57
    %73 = vmatmul.bf16.gmra.mxu0 %v63
    %v74 = vpop.f32.mrf.mxu0
    %v75 = vadd.f32 %v47, %v74
    %v76 = vpop.f32.mrf.mxu0
    %77 = vdwg.mxu0
    %v78 = vmax.f32 %v75, 0.0
    %v79 = vadd.f32 %v78, 0.0
    %s80 = scalar_lea.vmem [#allocation2], 16
    %v81 = vld [vmem:[%s80] sm:$0xf]
    %v82 = vld [vmem:[%s80 + $0x4] sm:$0xf]
    %v83 = vld [vmem:[%s80 + $0x8] sm:$0xf]
    %v84 = vld [vmem:[%s80 + $0xc] sm:$0xf]
    %v89 = vunpack.c.l.b16 %v81
    %v90 = vunpack.c.l.b16 %v82
    %v91 = vunpack.c.l.b16 %v83
    %v92 = vunpack.c.l.b16 %v84
    %v93 = vpack.c.b16 %v90, %v89
    %v94 = vpack.c.b16 %v92, %v91
    %97 = vmatpush.bf16.msra.mxu0 0
    %98 = vmatpush.bf16.msra.mxu0 0
    %99 = vmatpush.bf16.msra.mxu0 0
    %100 = vmatpush.bf16.msra.mxu0 0
    %101 = vmatpush.bf16.msra.mxu0 0
    %102 = vmatpush.bf16.msra.mxu0 0
    %103 = vmatpush.bf16.msra.mxu0 %v94
    %104 = vmatpush.bf16.msra.mxu0 %v93
    %105 = vmatmul.bf16.gmra.mxu0 %v63
    %v106 = vpop.f32.mrf.mxu0
    %v107 = vadd.f32 %v47, %v106
    %v108 = vpop.f32.mrf.mxu0
    %109 = vdwg.mxu0
    %v110 = vmax.f32 %v107, 0.0
    %v111 = vadd.f32 %v79, %v110
    %s112 = scalar_lea.vmem [#allocation2], 32
    %v113 = vld [vmem:[%s112] sm:$0xf]
    %v114 = vld [vmem:[%s112 + $0x4] sm:$0xf]
    %v115 = vld [vmem:[%s112 + $0x8] sm:$0xf]
    %v116 = vld [vmem:[%s112 + $0xc] sm:$0xf]
    %v121 = vunpack.c.l.b16 %v113
    %v122 = vunpack.c.l.b16 %v114
    %v123 = vunpack.c.l.b16 %v115
    %v124 = vunpack.c.l.b16 %v116
    %v125 = vpack.c.b16 %v122, %v121
    %v126 = vpack.c.b16 %v124, %v123
    %129 = vmatpush.bf16.msra.mxu0 0
    %130 = vmatpush.bf16.msra.mxu0 0
    %131 = vmatpush.bf16.msra.mxu0 0
    %132 = vmatpush.bf16.msra.mxu0 0
    %133 = vmatpush.bf16.msra.mxu0 0
    %134 = vmatpush.bf16.msra.mxu0 0
    %135 = vmatpush.bf16.msra.mxu0 %v126
    %136 = vmatpush.bf16.msra.mxu0 %v125
    %137 = vmatmul.bf16.gmra.mxu0 %v63
    %v138 = vpop.f32.mrf.mxu0
    %v139 = vadd.f32 %v47, %v138
    %v140 = vpop.f32.mrf.mxu0
    %141 = vdwg.mxu0
    %v142 = vmax.f32 %v139, 0.0
    %v143 = vadd.f32 %v111, %v142
    %s144 = scalar_lea.vmem [#allocation2], 48
    %v145 = vld [vmem:[%s144] sm:$0xf]
    %v146 = vld [vmem:[%s144 + $0x4] sm:$0xf]
    %v147 = vld [vmem:[%s144 + $0x8] sm:$0xf]
    %v148 = vld [vmem:[%s144 + $0xc] sm:$0xf]
    %v153 = vunpack.c.l.b16 %v145
    %v154 = vunpack.c.l.b16 %v146
    %v155 = vunpack.c.l.b16 %v147
    %v156 = vunpack.c.l.b16 %v148
    %v157 = vpack.c.b16 %v154, %v153
    %v158 = vpack.c.b16 %v156, %v155
    %161 = vmatpush.bf16.msra.mxu0 0
    %162 = vmatpush.bf16.msra.mxu0 0
    %163 = vmatpush.bf16.msra.mxu0 0
    %164 = vmatpush.bf16.msra.mxu0 0
    %165 = vmatpush.bf16.msra.mxu0 0
    %166 = vmatpush.bf16.msra.mxu0 0
    %167 = vmatpush.bf16.msra.mxu0 %v158
    %168 = vmatpush.bf16.msra.mxu0 %v157
    %169 = vmatmul.bf16.gmra.mxu0 %v63
    %v170 = vpop.f32.mrf.mxu0
    %v171 = vadd.f32 %v47, %v170
    %v172 = vpop.f32.mrf.mxu0
    %173 = vdwg.mxu0
    %v174 = vmax.f32 %v171, 0.0
    %v175 = vadd.f32 %v143, %v174
    %v176 = vld [vmem:[%s3] sm:$0xf]
    %v177 = vld [vmem:[%s4] sm:$0xf]
    %179 = vset.pattern.permute.xlu0 0
    %180 = vperm.xlu0 %179, %v177
    %v181 = vpop.permute.xlu0 %180
    %vm183 = vcmask 64512
    %v185 = vsel %vm183, %v176, 0
    %187 = vmatpush.msra.mxu0 0.0
    %188 = vmatpush.msra.mxu0 0.0
    %189 = vmatpush.msra.mxu0 0.0
    %190 = vmatpush.msra.mxu0 0.0
    %191 = vmatpush.msra.mxu0 0.0
    %192 = vmatpush.msra.mxu0 0.0
    %193 = vmatpush.msra.mxu0 0.0
    %194 = vmatpush.msra.mxu0 0.0
    %195 = vmatpush.msra.mxu0 0.0
    %196 = vmatpush.msra.mxu0 0.0
    %197 = vmatpush.msra.mxu0 0.0
    %198 = vmatpush.msra.mxu0 0.0
    %199 = vmatpush.msra.mxu0 0.0
    %200 = vmatpush.msra.mxu0 0.0
    %201 = vmatpush.msra.mxu0 0.0
    %202 = vmatpush.msra.mxu0 %v175
    %203 = vmatmul.f32.gmra.mxu0 %v185
    %v204 = vpop.f32.mrf.mxu0
    %v205 = vadd.f32 %v181, %v204
    %206 = vdwg.mxu0
    %v207 = vmax.f32 %v205, -7.0
    %208 = vst [vmem:[#allocation5] sm:$0xf] %v207
    // Predicated region
    $region26: #{tpu_custom_call.1} parent=1 // pred_check
      _
    $region27: #{tpu_custom_call.1} parent=1 // pred_check_branch
      %210 = sbr.rel (0) target = $region29
    $region28: #{tpu_custom_call.1} parent=1 // pred_region
      %212 = vsyncadd [#allocation4], 0
      %s214 = sshll.u32 [#allocation5], 4
      %s215 = int_to_ptr.vmem [resolvable:$true] %s214
      %s216 = sshll.u32 %s5, 4
      %s217 = int_to_ptr.hbm [resolvable:$true] %s216
      %219 = dma.vmem_to_hbm [thread:$0]  %s215, 64, %s217, [#allocation4]
    $region29: #{tpu_custom_call.1} parent=1 // pred_fallthru
      _
    // Predicated region
    $region30: #{tpu_custom_call.1} parent=1 // pred_check
      _
    $region31: #{tpu_custom_call.1} parent=1 // pred_check_branch
      %221 = sbr.rel (0) target = $region33
    $region32: #{tpu_custom_call.1} parent=1 // pred_region
      %223 = dma.done [#allocation4], 64
    $region33: #{tpu_custom_call.1} parent=1 // pred_fallthru
      _
    %224 = vsyncpa [#allocation3], 1
    %225 = vsyncpa [#allocation4], 1

</llo_original>
